<compile_context>
chip_gen: v5e
topology: v5e:2x2
jax: 0.10.0
libtpu: 0.0.40
codegen_flags: <defaults>
</compile_context>

<pallas_src>
import functools

import numpy as np
import jax
import jax.numpy as jnp
from jax.experimental import pallas as pl
from jax.experimental.pallas import tpu as pltpu


def _conv2d_block_kernel(*refs, taps, needs_select):
    if needs_select:
        x_ref, w_ref, mask_ref, sel_ref, o_ref = refs
    else:
        x_ref, w_ref, mask_ref, o_ref = refs
        sel_ref = None

    cin, s = x_ref.shape            # (Cin, H_ext*W_ext), lane-dense
    k_pad = w_ref.shape[1]

    xb = x_ref[...]                 # (Cin, S)
    masks = mask_ref[...]           # (KH*KW, S) 0/1 zero-padding border masks

    pieces = []
    for t, off in enumerate(taps):
        rot = off % s
        # Lane rotation by `rot` (== jnp.roll(xb, -off, axis=1)): after it,
        # lane p holds x[p + off].  Wrapped / out-of-range lanes are zeroed by
        # the mask -> zero-padding semantics with only XLU slices + VPU mults.
        if rot == 0:
            shifted = xb
        else:
            shifted = jnp.concatenate([xb[:, rot:], xb[:, :rot]], axis=1)
        pieces.append(shifted * masks[t:t + 1])

    n_k = len(taps) * cin + 1
    pieces.append(jnp.ones((1, s), xb.dtype))                   # bias lane (w2[:, K] = bias)
    if k_pad > n_k:
        pieces.append(jnp.zeros((k_pad - n_k, s), xb.dtype))    # tiny K tail (w2 cols are 0)

    # Already (K_pad, M)-oriented: one MXU matmul, no transposed copy of cols.
    cols_t = jnp.concatenate(pieces, axis=0)                    # (K_pad, S)
    y = jnp.dot(w_ref[...], cols_t, preferred_element_type=jnp.float32)   # (Cout, S)

    if sel_ref is not None:
        # stride>1 / cropped output: project the stride-1 map onto the output
        # grid with a 0/1 selection matrix (one extra tiny matmul).
        y = jnp.dot(y, sel_ref[...], preferred_element_type=jnp.float32)  # (Cout, M)

    o_ref[...] = jnp.maximum(y, 0.0).astype(o_ref.dtype)        # (bias already folded) + ReLU


def conv2d_block(x_nchw, weight, bias, *, stride=1, padding=0, dilation=1,
                 compute_dtype=None):
    """Conv2dBlock.forward: ZeroPad2d(padding) -> Conv2d(stride, dilation, bias) -> ReLU."""
    B, Cin, H, W = x_nchw.shape
    Cout, Cin_w, KH, KW = weight.shape
    assert Cin_w == Cin
    OH = (H + 2 * padding - dilation * (KH - 1) - 1) // stride + 1
    OW = (W + 2 * padding - dilation * (KW - 1) - 1) // stride + 1
    M = OH * OW
    out_dtype = x_nchw.dtype
    cdt = out_dtype if compute_dtype is None else compute_dtype

    # Extended grid so every output position (oh*stride, ow*stride) is
    # addressable on the stride-1 map (only matters for over-padded convs).
    H_ext = max(H, (OH - 1) * stride + 1)
    W_ext = max(W, (OW - 1) * stride + 1)
    S = H_ext * W_ext
    if (H_ext, W_ext) != (H, W):
        x_nchw = jnp.pad(x_nchw, ((0, 0), (0, 0), (0, H_ext - H), (0, W_ext - W)))
    # Channel-planar, lane-dense layout: a reshape only, no transpose.
    xf = x_nchw.reshape(B, Cin, S).astype(cdt)

    # Weights: (Cout, Cin, KH, KW) -> (Cout, K) with K ordered (kh, kw, ci);
    # bias folded in as column K; zero-padded to a sublane-friendly K_pad.
    K = KH * KW * Cin
    K_pad = -(-(K + 1) // 16) * 16
    w2 = jnp.transpose(weight, (0, 2, 3, 1)).reshape(Cout, K)
    w2 = jnp.concatenate(
        [w2, bias.reshape(Cout, 1), jnp.zeros((Cout, K_pad - K - 1), w2.dtype)],
        axis=1).astype(cdt)

    # Static per-tap data: flat lane offset + 0/1 zero-padding border mask.
    taps = []
    masks = np.zeros((KH * KW, H_ext, W_ext), np.float32)
    for kh in range(KH):
        for kw in range(KW):
            off_h = kh * dilation - padding
            off_w = kw * dilation - padding
            taps.append(off_h * W_ext + off_w)
            row_ok = (np.arange(H_ext) + off_h >= 0) & (np.arange(H_ext) + off_h < H)
            col_ok = (np.arange(W_ext) + off_w >= 0) & (np.arange(W_ext) + off_w < W)
            masks[kh * KW + kw] = row_ok[:, None] & col_ok[None, :]
    masks = jnp.asarray(masks.reshape(KH * KW, S), dtype=cdt)

    needs_select = not (stride == 1 and OH == H_ext and OW == W_ext)
    inputs = [xf, w2, masks]
    in_specs = [
        pl.BlockSpec((None, Cin, S), lambda b: (b, 0, 0)),   # per-batch x block
        pl.BlockSpec((Cout, K_pad), lambda b: (0, 0)),       # resident weights+bias
        pl.BlockSpec((KH * KW, S), lambda b: (0, 0)),        # resident border masks
    ]
    if needs_select:
        sel = np.zeros((S, M), np.float32)
        oh, ow = np.meshgrid(np.arange(OH), np.arange(OW), indexing="ij")
        sel[(oh * stride * W_ext + ow * stride).reshape(-1), np.arange(M)] = 1.0
        inputs.append(jnp.asarray(sel, dtype=cdt))
        in_specs.append(pl.BlockSpec((S, M), lambda b: (0, 0)))

    kernel = functools.partial(_conv2d_block_kernel, taps=tuple(taps),
                               needs_select=needs_select)

    out = pl.pallas_call(
        kernel,
        out_shape=jax.ShapeDtypeStruct((B, Cout, M), out_dtype),
        grid=(B,),
        in_specs=in_specs,
        out_specs=pl.BlockSpec((None, Cout, M), lambda b: (b, 0, 0)),
        compiler_params=pltpu.CompilerParams(
            dimension_semantics=("parallel",),        # v7x: batches across TensorCores
            vmem_limit_bytes=32 * 1024 * 1024),
    )(*inputs)

    # (B, Cout, OH*OW) -> (B, Cout, OH, OW): reshape only, no transpose.
    return out.reshape(B, Cout, OH, OW)


def _reference(x, weight, bias, stride, padding, dilation):
    y = jax.lax.conv_general_dilated(
        x, weight,
        window_strides=(stride, stride),
        padding=((padding, padding), (padding, padding)),
        rhs_dilation=(dilation, dilation),
        dimension_numbers=("NCHW", "OIHW", "NCHW"),
        precision=jax.lax.Precision.HIGHEST)
    return jnp.maximum(y + bias.reshape(1, -1, 1, 1), 0.0)


if __name__ == "__main__":
    # Module config: Conv2dBlock(in_dim=4, out_dim=8, ks=3, st=1, padding=1,
    #                            norm='none', activation='relu', pad_type='zero')
    B, Cin, H, W, Cout, KS = 2, 4, 16, 16, 8, 3
    key = jax.random.PRNGKey(0)
    kx, kw, kb = jax.random.split(key, 3)
    x = jax.random.normal(kx, (B, Cin, H, W), dtype=jnp.float32)
    weight = jax.random.normal(kw, (Cout, Cin, KS, KS), dtype=jnp.float32) / np.sqrt(Cin * KS * KS)
    bias = jax.random.normal(kb, (Cout,), dtype=jnp.float32) * 0.1

    # (stride, padding, dilation): the module instance (1,1,1) plus the
    # stride>1 and dilation>1 paths flagged by the review.
    for st, pad, dil in [(1, 1, 1), (2, 1, 1), (1, 2, 2)]:
        fwd = jax.jit(functools.partial(conv2d_block, stride=st, padding=pad, dilation=dil))
        out = jax.block_until_ready(fwd(x, weight, bias))
        ref = _reference(x, weight, bias, st, pad, dil)
        assert out.shape == ref.shape, (out.shape, ref.shape)
        err = float(jnp.max(jnp.abs(out - ref)))
        assert err < 5e-2, (st, pad, dil, err)

    # bf16 MXU-operand path (v6e/v7x native), f32 accumulation.
    fwd_bf16 = jax.jit(functools.partial(conv2d_block, stride=1, padding=1, dilation=1,
                                         compute_dtype=jnp.bfloat16))
    out = jax.block_until_ready(fwd_bf16(x, weight, bias))
    ref = _reference(x, weight, bias, 1, 1, 1)
    err_bf16 = float(jnp.max(jnp.abs(out - ref)))
    assert err_bf16 < 1e-1, err_bf16

    print("KERNEL_OK")
</pallas_src>

<mosaic_0001>
module attributes {stable_mosaic.version = 11 : i64} {
  func.func @_conv2d_block_kernel(%arg0: i32, %arg1: memref<1x4x256xf32, #tpu.memory_space<vmem>>, %arg2: memref<8x48xf32, #tpu.memory_space<vmem>>, %arg3: memref<9x256xf32, #tpu.memory_space<vmem>>, %arg4: memref<1x8x256xf32, #tpu.memory_space<vmem>>) attributes {dimension_semantics = [#tpu.dimension_semantics<parallel>], iteration_bounds = array<i64: 2>, scalar_prefetch = 0 : i64, scratch_operands = 0 : i64, tpu.core_type = #tpu.core_type<tc>, window_params = [{transform_indices = @transform_0, window_bounds = array<i64: 1, 4, 256>}, {pipeline_mode = #tpu.pipeline_mode<synchronous>, transform_indices = @transform_1, window_bounds = array<i64: 8, 48>}, {pipeline_mode = #tpu.pipeline_mode<synchronous>, transform_indices = @transform_2, window_bounds = array<i64: 9, 256>}, {transform_indices = @transform_3, window_bounds = array<i64: 1, 8, 256>}]} {
    %c0 = arith.constant 0 : index
    %c0_0 = arith.constant 0 : index
    %c0_1 = arith.constant 0 : index
    %0 = vector.load %arg1[%c0, %c0_0, %c0_1] : memref<1x4x256xf32, #tpu.memory_space<vmem>>, vector<1x4x256xf32>
    %1 = vector.shape_cast %0 : vector<1x4x256xf32> to vector<4x256xf32>
    %c0_2 = arith.constant 0 : index
    %c0_3 = arith.constant 0 : index
    %2 = vector.load %arg3[%c0_2, %c0_3] : memref<9x256xf32, #tpu.memory_space<vmem>>, vector<9x256xf32>
    %3 = vector.extract_strided_slice %1 {offsets = [0, 239], sizes = [4, 17], strides = [1, 1]} : vector<4x256xf32> to vector<4x17xf32>
    %4 = vector.extract_strided_slice %1 {offsets = [0, 0], sizes = [4, 239], strides = [1, 1]} : vector<4x256xf32> to vector<4x239xf32>
    %5 = tpu.concatenate %3, %4 in 1 : vector<4x17xf32>, vector<4x239xf32> -> vector<4x256xf32>
    %6 = vector.extract_strided_slice %2 {offsets = [0, 0], sizes = [1, 256], strides = [1, 1]} : vector<9x256xf32> to vector<1x256xf32>
    %7 = vector.broadcast %6 : vector<1x256xf32> to vector<4x256xf32>
    %8 = arith.mulf %5, %7 : vector<4x256xf32>
    %9 = vector.extract_strided_slice %1 {offsets = [0, 240], sizes = [4, 16], strides = [1, 1]} : vector<4x256xf32> to vector<4x16xf32>
    %10 = vector.extract_strided_slice %1 {offsets = [0, 0], sizes = [4, 240], strides = [1, 1]} : vector<4x256xf32> to vector<4x240xf32>
    %11 = tpu.concatenate %9, %10 in 1 : vector<4x16xf32>, vector<4x240xf32> -> vector<4x256xf32>
    %12 = vector.extract_strided_slice %2 {offsets = [1, 0], sizes = [1, 256], strides = [1, 1]} : vector<9x256xf32> to vector<1x256xf32>
    %13 = vector.broadcast %12 : vector<1x256xf32> to vector<4x256xf32>
    %14 = arith.mulf %11, %13 : vector<4x256xf32>
    %15 = vector.extract_strided_slice %1 {offsets = [0, 241], sizes = [4, 15], strides = [1, 1]} : vector<4x256xf32> to vector<4x15xf32>
    %16 = vector.extract_strided_slice %1 {offsets = [0, 0], sizes = [4, 241], strides = [1, 1]} : vector<4x256xf32> to vector<4x241xf32>
    %17 = tpu.concatenate %15, %16 in 1 : vector<4x15xf32>, vector<4x241xf32> -> vector<4x256xf32>
    %18 = vector.extract_strided_slice %2 {offsets = [2, 0], sizes = [1, 256], strides = [1, 1]} : vector<9x256xf32> to vector<1x256xf32>
    %19 = vector.broadcast %18 : vector<1x256xf32> to vector<4x256xf32>
    %20 = arith.mulf %17, %19 : vector<4x256xf32>
    %21 = vector.extract_strided_slice %1 {offsets = [0, 255], sizes = [4, 1], strides = [1, 1]} : vector<4x256xf32> to vector<4x1xf32>
    %22 = vector.extract_strided_slice %1 {offsets = [0, 0], sizes = [4, 255], strides = [1, 1]} : vector<4x256xf32> to vector<4x255xf32>
    %23 = tpu.concatenate %21, %22 in 1 : vector<4x1xf32>, vector<4x255xf32> -> vector<4x256xf32>
    %24 = vector.extract_strided_slice %2 {offsets = [3, 0], sizes = [1, 256], strides = [1, 1]} : vector<9x256xf32> to vector<1x256xf32>
    %25 = vector.broadcast %24 : vector<1x256xf32> to vector<4x256xf32>
    %26 = arith.mulf %23, %25 : vector<4x256xf32>
    %27 = vector.extract_strided_slice %2 {offsets = [4, 0], sizes = [1, 256], strides = [1, 1]} : vector<9x256xf32> to vector<1x256xf32>
    %28 = vector.broadcast %27 : vector<1x256xf32> to vector<4x256xf32>
    %29 = arith.mulf %1, %28 : vector<4x256xf32>
    %30 = vector.extract_strided_slice %1 {offsets = [0, 1], sizes = [4, 255], strides = [1, 1]} : vector<4x256xf32> to vector<4x255xf32>
    %31 = vector.extract_strided_slice %1 {offsets = [0, 0], sizes = [4, 1], strides = [1, 1]} : vector<4x256xf32> to vector<4x1xf32>
    %32 = tpu.concatenate %30, %31 in 1 : vector<4x255xf32>, vector<4x1xf32> -> vector<4x256xf32>
    %33 = vector.extract_strided_slice %2 {offsets = [5, 0], sizes = [1, 256], strides = [1, 1]} : vector<9x256xf32> to vector<1x256xf32>
    %34 = vector.broadcast %33 : vector<1x256xf32> to vector<4x256xf32>
    %35 = arith.mulf %32, %34 : vector<4x256xf32>
    %36 = vector.extract_strided_slice %1 {offsets = [0, 15], sizes = [4, 241], strides = [1, 1]} : vector<4x256xf32> to vector<4x241xf32>
    %37 = vector.extract_strided_slice %1 {offsets = [0, 0], sizes = [4, 15], strides = [1, 1]} : vector<4x256xf32> to vector<4x15xf32>
    %38 = tpu.concatenate %36, %37 in 1 : vector<4x241xf32>, vector<4x15xf32> -> vector<4x256xf32>
    %39 = vector.extract_strided_slice %2 {offsets = [6, 0], sizes = [1, 256], strides = [1, 1]} : vector<9x256xf32> to vector<1x256xf32>
    %40 = vector.broadcast %39 : vector<1x256xf32> to vector<4x256xf32>
    %41 = arith.mulf %38, %40 : vector<4x256xf32>
    %42 = vector.extract_strided_slice %1 {offsets = [0, 16], sizes = [4, 240], strides = [1, 1]} : vector<4x256xf32> to vector<4x240xf32>
    %43 = vector.extract_strided_slice %1 {offsets = [0, 0], sizes = [4, 16], strides = [1, 1]} : vector<4x256xf32> to vector<4x16xf32>
    %44 = tpu.concatenate %42, %43 in 1 : vector<4x240xf32>, vector<4x16xf32> -> vector<4x256xf32>
    %45 = vector.extract_strided_slice %2 {offsets = [7, 0], sizes = [1, 256], strides = [1, 1]} : vector<9x256xf32> to vector<1x256xf32>
    %46 = vector.broadcast %45 : vector<1x256xf32> to vector<4x256xf32>
    %47 = arith.mulf %44, %46 : vector<4x256xf32>
    %48 = vector.extract_strided_slice %1 {offsets = [0, 17], sizes = [4, 239], strides = [1, 1]} : vector<4x256xf32> to vector<4x239xf32>
    %49 = vector.extract_strided_slice %1 {offsets = [0, 0], sizes = [4, 17], strides = [1, 1]} : vector<4x256xf32> to vector<4x17xf32>
    %50 = tpu.concatenate %48, %49 in 1 : vector<4x239xf32>, vector<4x17xf32> -> vector<4x256xf32>
    %51 = vector.extract_strided_slice %2 {offsets = [8, 0], sizes = [1, 256], strides = [1, 1]} : vector<9x256xf32> to vector<1x256xf32>
    %52 = vector.broadcast %51 : vector<1x256xf32> to vector<4x256xf32>
    %53 = arith.mulf %50, %52 : vector<4x256xf32>
    %cst = arith.constant 1.000000e+00 : f32
    %54 = vector.broadcast %cst : f32 to vector<1x256xf32>
    %cst_4 = arith.constant 0.000000e+00 : f32
    %55 = vector.broadcast %cst_4 : f32 to vector<11x256xf32>
    %56 = tpu.concatenate %8, %14, %20, %26, %29, %35, %41, %47, %53, %54, %55 in 0 : vector<4x256xf32>, vector<4x256xf32>, vector<4x256xf32>, vector<4x256xf32>, vector<4x256xf32>, vector<4x256xf32>, vector<4x256xf32>, vector<4x256xf32>, vector<4x256xf32>, vector<1x256xf32>, vector<11x256xf32> -> vector<48x256xf32>
    %c0_5 = arith.constant 0 : index
    %c0_6 = arith.constant 0 : index
    %57 = vector.load %arg2[%c0_5, %c0_6] : memref<8x48xf32, #tpu.memory_space<vmem>>, vector<8x48xf32>
    %cst_7 = arith.constant dense<0.000000e+00> : vector<8x256xf32>
    %58 = tpu.matmul %57, %56, %cst_7 {dimension_numbers = #tpu.dot_dimension_numbers<[1], [0], [0], [1], [0, 0, 1, 1], [], []>} : vector<8x48xf32>, vector<48x256xf32>, vector<8x256xf32> -> vector<8x256xf32>
    %cst_8 = arith.constant 0.000000e+00 : f32
    %59 = vector.broadcast %cst_8 : f32 to vector<8x256xf32>
    %60 = arith.maximumf %58, %59 : vector<8x256xf32>
    %c0_9 = arith.constant 0 : index
    %c0_10 = arith.constant 0 : index
    %c0_11 = arith.constant 0 : index
    %61 = vector.load %arg4[%c0_9, %c0_10, %c0_11] : memref<1x8x256xf32, #tpu.memory_space<vmem>>, vector<1x8x256xf32>
    %62 = vector.shape_cast %61 : vector<1x8x256xf32> to vector<8x256xf32>
    %63 = vector.shape_cast %60 : vector<8x256xf32> to vector<1x8x256xf32>
    tpu.vector_store %arg4[%c0_9, %c0_10, %c0_11], %63 {strides = array<i32>} : memref<1x8x256xf32, #tpu.memory_space<vmem>>, vector<1x8x256xf32>,
    return
  }
  func.func @transform_0(%arg0: i32) -> (i32, i32, i32) {
    %c0_i32 = arith.constant 0 : i32
    %c0_i32_0 = arith.constant 0 : i32
    %c0_i32_1 = arith.constant 0 : i32
    return %arg0, %c0_i32, %c0_i32_0 : i32, i32, i32
  }
  func.func @transform_1(%arg0: i32) -> (i32, i32) {
    %c0_i32 = arith.constant 0 : i32
    %c0_i32_0 = arith.constant 0 : i32
    %c0_i32_1 = arith.constant 0 : i32
    return %c0_i32, %c0_i32_0 : i32, i32
  }
  func.func @transform_2(%arg0: i32) -> (i32, i32) {
    %c0_i32 = arith.constant 0 : i32
    %c0_i32_0 = arith.constant 0 : i32
    %c0_i32_1 = arith.constant 0 : i32
    return %c0_i32, %c0_i32_0 : i32, i32
  }
  func.func @transform_3(%arg0: i32) -> (i32, i32, i32) {
    %c0_i32 = arith.constant 0 : i32
    %c0_i32_0 = arith.constant 0 : i32
    %c0_i32_1 = arith.constant 0 : i32
    return %arg0, %c0_i32, %c0_i32_0 : i32, i32, i32
  }
}

</mosaic_0001>

<llo_original>
// kernel: conv2d_block.1
$region0: #{conv2d_block.1}
  #allocation0 [shape = 'u32[]', space=smem, size = 0x4, offset = 0x4, fixed_abs, tag = 'smem constant byte address 0x4 - core index']
  #allocation1 [shape = 'u32[72,128]{1,0:T(1,128)}', space=vmem, size = 0x9000, scoped, tag = 'internal scratch']
  %s0 = inlined_call_operand.vmem [shape: f32[2,4,256], index: 0, kind: input, shape index: {}]
  %s1 = inlined_call_operand.vmem [shape: f32[8,48], index: 1, kind: input, shape index: {}]
  %s2 = inlined_call_operand.vmem [shape: f32[9,256], index: 2, kind: input, shape index: {}]
  %s3 = inlined_call_operand.vmem [shape: f32[2,8,256], index: 3, kind: output, shape index: {}]
  %s4 = sld [smem:[#allocation0]]
  $region45: #{conv2d_block.1} parent=0
    _
  %s6 = ssub.s32 1, %s4
  %s7 = scalar_select 0, %s6, %s4
  loop: start=0, step=1, limit=4
  $region2: #{conv2d_block.1} parent=0 // loop_pre_header
    _
  $region3: #{conv2d_block.1} parent=0 // loop_header
    %s9 = sphi 0, %s13
    %p10 = scmp.ge.s32.totalorder %s9, 4
    %s19 = sphi 0, %s21
    %s22 = sphi 0, %s19
    %s23 = sphi 0, %s22
    %s39 = sphi 0, %s23
    %s43 = sphi 0, %s43
    %s45 = sphi 0, %s43
    %s46 = sphi 0, %s45
    %s60 = sphi 0, %s46
    %s64 = sphi 0, %s64
    %s66 = sphi 0, %s64
    %s67 = sphi 0, %s66
    %s81 = sphi 0, %s67
    %s87 = sphi 0, %s89
    %s90 = sphi 0, %s87
    %s91 = sphi 0, %s90
    %s107 = sphi 0, %s91
  $region4: #{conv2d_block.1} parent=0 // loop_header_branch
    %12 = sbr.rel (%p10) target = $region8
  $region5: #{conv2d_block.1} parent=0 // loop_body
    %s14 = ssub.s32 %s9, 1
    %s15 = ssub.s32 %s9, 2
    %s16 = sadd.s32 %s9, 1
    %s17 = ssub.s32 %s9, %s16
    %p18 = scmp.eq.s32.totalorder %s17, 0
    %s20 = sadd.s32 %s19, 1
    %s21 = scalar_select %p18, %s19, %s20
    %p24 = pneg %p18
    %p25 = scmp.eq.s32.totalorder %s9, 1
    %p26 = por %p24, %p25
    %p27 = scmp.ne.s32.totalorder %s19, %s22
    %p28 = scmp.eq.s32.totalorder %s9, 0
    %p29 = por %p27, %p28
    %p30 = scmp.ne.s32.totalorder %s19, %s22
    %p31 = scmp.eq.s32.totalorder %s14, 1
    %p32 = por %p30, %p31
    %p33 = scmp.ne.s32.totalorder %s22, %s23
    %p34 = scmp.eq.s32.totalorder %s14, 0
    %p35 = por %p33, %p34
    %p36 = scmp.ne.s32.totalorder %s22, %s23
    %p37 = scmp.eq.s32.totalorder %s15, 1
    %p38 = por %p36, %p37
    %p40 = scmp.ne.s32.totalorder %s23, %s39
    %p41 = scmp.eq.s32.totalorder %s15, 0
    %p42 = por %p40, %p41
    %s44 = sadd.s32 %s43, 1
    %p47 = scmp.eq.s32.totalorder %s9, 1
    %p48 = scmp.ne.s32.totalorder %s43, %s45
    %p49 = scmp.eq.s32.totalorder %s9, 0
    %p50 = por %p48, %p49
    %p51 = scmp.ne.s32.totalorder %s43, %s45
    %p52 = scmp.eq.s32.totalorder %s14, 1
    %p53 = por %p51, %p52
    %p54 = scmp.ne.s32.totalorder %s45, %s46
    %p55 = scmp.eq.s32.totalorder %s14, 0
    %p56 = por %p54, %p55
    %p57 = scmp.ne.s32.totalorder %s45, %s46
    %p58 = scmp.eq.s32.totalorder %s15, 1
    %p59 = por %p57, %p58
    %p61 = scmp.ne.s32.totalorder %s46, %s60
    %p62 = scmp.eq.s32.totalorder %s15, 0
    %p63 = por %p61, %p62
    %s65 = sadd.s32 %s64, 1
    %p68 = scmp.eq.s32.totalorder %s9, 1
    %p69 = scmp.ne.s32.totalorder %s64, %s66
    %p70 = scmp.eq.s32.totalorder %s9, 0
    %p71 = por %p69, %p70
    %p72 = scmp.ne.s32.totalorder %s64, %s66
    %p73 = scmp.eq.s32.totalorder %s14, 1
    %p74 = por %p72, %p73
    %p75 = scmp.ne.s32.totalorder %s66, %s67
    %p76 = scmp.eq.s32.totalorder %s14, 0
    %p77 = por %p75, %p76
    %p78 = scmp.ne.s32.totalorder %s66, %s67
    %p79 = scmp.eq.s32.totalorder %s15, 1
    %p80 = por %p78, %p79
    %p82 = scmp.ne.s32.totalorder %s67, %s81
    %p83 = scmp.eq.s32.totalorder %s15, 0
    %p84 = por %p82, %p83
    %s85 = ssub.s32 %s9, %s16
    %p86 = scmp.eq.s32.totalorder %s85, 0
    %s88 = sadd.s32 %s87, 1
    %s89 = scalar_select %p86, %s87, %s88
    %p92 = pneg %p86
    %p93 = scmp.eq.s32.totalorder %s9, 1
    %p94 = por %p92, %p93
    %p95 = scmp.ne.s32.totalorder %s87, %s90
    %p96 = scmp.eq.s32.totalorder %s9, 0
    %p97 = por %p95, %p96
    %p98 = scmp.ne.s32.totalorder %s87, %s90
    %p99 = scmp.eq.s32.totalorder %s14, 1
    %p100 = por %p98, %p99
    %p101 = scmp.ne.s32.totalorder %s90, %s91
    %p102 = scmp.eq.s32.totalorder %s14, 0
    %p103 = por %p101, %p102
    %p104 = scmp.ne.s32.totalorder %s90, %s91
    %p105 = scmp.eq.s32.totalorder %s15, 1
    %p106 = por %p104, %p105
    %p108 = scmp.ne.s32.totalorder %s91, %s107
    %p109 = scmp.eq.s32.totalorder %s15, 0
    %p110 = por %p108, %p109
    %p111 = scmp.le.s32.totalorder 1, %s9
    %p112 = scmp.lt.s32.totalorder %s9, 3
    %p113 = pnand %p111, %p112
    %p114 = pneg %p113
    // Predicated region
    $region9: #{conv2d_block.1} parent=5 // pred_check
      _
    $region10: #{conv2d_block.1} parent=5 // pred_check_branch
      %116 = sbr.rel (%p113) target = $region12
    $region11: #{conv2d_block.1} parent=5 // pred_region
      %s117 = ssub.s32 %s9, 1
      // Predicated region
      $region13: #{conv2d_block.1} parent=11 // pred_check
        %p118 = pneg %p56
      $region14: #{conv2d_block.1} parent=11 // pred_check_branch
        %120 = sbr.rel (%p118) target = $region16
      $region15: #{conv2d_block.1} parent=11 // pred_region
        _
      $region16: #{conv2d_block.1} parent=11 // pred_fallthru
        _
      // Predicated region
      $region17: #{conv2d_block.1} parent=11 // pred_check
        %p121 = pneg %p77
      $region18: #{conv2d_block.1} parent=11 // pred_check_branch
        %123 = sbr.rel (%p121) target = $region20
      $region19: #{conv2d_block.1} parent=11 // pred_region
        _
      $region20: #{conv2d_block.1} parent=11 // pred_fallthru
        _
    $region12: #{conv2d_block.1} parent=5 // pred_fallthru
      _
    %p124 = scmp.lt.s32.totalorder %s9, 2
    // Predicated region
    $region21: #{conv2d_block.1} parent=5 // pred_check
      %p125 = pneg %p124
    $region22: #{conv2d_block.1} parent=5 // pred_check_branch
      %127 = sbr.rel (%p125) target = $region24
    $region23: #{conv2d_block.1} parent=5 // pred_region
      // Predicated region
      $region25: #{conv2d_block.1} parent=23 // pred_check
        %p128 = pneg %p29
      $region26: #{conv2d_block.1} parent=23 // pred_check_branch
        %130 = sbr.rel (%p128) target = $region28
      $region27: #{conv2d_block.1} parent=23 // pred_region
        %p131 = scmp.lt.s32.totalorder %s9, 1
        %s132 = scalar_select %p131, %s9, 1
        %s133 = smul.addr %s132, 2
        %s134 = smul.addr %s133, 4
        %s135 = scalar_lea.vmem %s0, %s134
      $region28: #{conv2d_block.1} parent=23 // pred_fallthru
        _
    $region24: #{conv2d_block.1} parent=5 // pred_fallthru
      _
    %p136 = scmp.le.s32.totalorder 1, %s9
    %p137 = scmp.lt.s32.totalorder %s9, 3
    %p138 = pnand %p136, %p137
    %p139 = pneg %p138
    // Predicated region
    $region29: #{conv2d_block.1} parent=5 // pred_check
      _
    $region30: #{conv2d_block.1} parent=5 // pred_check_branch
      %141 = sbr.rel (%p138) target = $region32
    $region31: #{conv2d_block.1} parent=5 // pred_region
      %s142 = ssub.s32 %s9, 1
      %p143 = scmp.lt.s32.totalorder %s14, 1
      %s144 = scalar_select %p143, %s14, 1
      %s145 = smul.addr %s144, 2
      %s146 = smul.addr %s145, 4
      %s147 = scalar_lea.vmem %s0, %s146
      %p148 = pneg %p35
      %p149 = pneg %p32
      %p150 = pneg %p56
      %p151 = pneg %p53
      %p152 = pneg %p77
      %p153 = pneg %p74
      %p154 = pneg %p103
      %p155 = pneg %p100
      %p156 = scmp.lt.s32.totalorder %s14, 1
      %s157 = scalar_select %p156, %s14, 1
      %s158 = smul.addr %s157, 2
      %s159 = smul.addr %s158, 8
      %s160 = scalar_lea.vmem %s3, %s159
      %p161 = scmp.lt.s32.totalorder %s14, 1
      %s162 = scalar_select %p161, %s14, 1
      %s163 = smul.addr %s162, 2
      %s164 = smul.addr %s163, 4
      %s165 = scalar_lea.vmem %s0, %s164
      %p166 = scmp.lt.s32.totalorder %s14, 1
      %s167 = scalar_select %p166, %s14, 1
      %s168 = smul.addr %s167, 2
      %s169 = smul.addr %s168, 8
      %s170 = scalar_lea.vmem %s3, %s169
      %v171 = vld [vmem:[%s165] sm:$0xff]
      %v172 = vld [vmem:[%s2] sm:$0xff]
      %v173 = vld [vmem:[%s2 + $0x8] sm:$0xff]
      %v174 = vld [vmem:[%s2 + $0x10] sm:$0x1]
      %v175 = vld [vmem:[%s2 + $0x18] sm:$0x1]
      %177 = vst [vmem:[#allocation1] ss:$2 sm:$0xff] %v171
      %v178 = vld.sshfl [vmem:[#allocation1 + $0x8] sm:$0xff pattern:$0x75316420]
      %179 = vrot.lane.b32.xlu0 %v178, 17
      %v180 = vpop.permute.xlu0 %179
      %182 = vst [vmem:[#allocation1] ss:$2 sm:$0xff] %v171
      %v183 = vld.sshfl [vmem:[#allocation1] sm:$0xff pattern:$0x75316420]
      %v184 = vld.sshfl [vmem:[#allocation1 + $0x8] sm:$0xff pattern:$0x75316420]
      %185 = vrot.lane.b32.xlu0 %v183, 17
      %v186 = vpop.permute.xlu0 %185
      %187 = vrot.lane.b32.xlu0 %v184, 17
      %v188 = vpop.permute.xlu0 %187
      %vm189 = vcmask 138240
      %v190 = vsel %vm189, %v186, %v188
      %v193 = vsel %vm189, %v180, %v186
      %v194 = vperm.slane %v172, 0
      %v195 = vperm.slane %v173, 0
      %v196 = vmul.f32 %v193, %v194
      %v197 = vmul.f32 %v190, %v195
      %198 = vst [vmem:[#allocation1] ss:$2 sm:$0xff] %v171
      %v199 = vld.sshfl [vmem:[#allocation1 + $0x8] sm:$0xff pattern:$0x75316420]
      %200 = vrot.lane.b32.xlu0 %v199, 16
      %v201 = vpop.permute.xlu0 %200
      %203 = vst [vmem:[#allocation1] ss:$2 sm:$0xff] %v171
      %v204 = vld.sshfl [vmem:[#allocation1] sm:$0xff pattern:$0x75316420]
      %v205 = vld.sshfl [vmem:[#allocation1 + $0x8] sm:$0xff pattern:$0x75316420]
      %206 = vrot.lane.b32.xlu0 %v204, 16
      %v207 = vpop.permute.xlu0 %206
      %208 = vrot.lane.b32.xlu0 %v205, 16
      %v209 = vpop.permute.xlu0 %208
      %vm210 = vcmask 130048
      %v211 = vsel %vm210, %v207, %v209
      %v214 = vsel %vm210, %v201, %v207
      %v215 = vperm.slane %v172, 1
      %v216 = vperm.slane %v173, 1
      %v217 = vmul.f32 %v214, %v215
      %v218 = vmul.f32 %v211, %v216
      %219 = vst [vmem:[#allocation1] ss:$2 sm:$0xff] %v171
      %v220 = vld.sshfl [vmem:[#allocation1 + $0x8] sm:$0xff pattern:$0x75316420]
      %221 = vrot.lane.b32.xlu0 %v220, 15
      %v222 = vpop.permute.xlu0 %221
      %224 = vst [vmem:[#allocation1] ss:$2 sm:$0xff] %v171
      %v225 = vld.sshfl [vmem:[#allocation1] sm:$0xff pattern:$0x75316420]
      %v226 = vld.sshfl [vmem:[#allocation1 + $0x8] sm:$0xff pattern:$0x75316420]
      %227 = vrot.lane.b32.xlu0 %v225, 15
      %v228 = vpop.permute.xlu0 %227
      %229 = vrot.lane.b32.xlu0 %v226, 15
      %v230 = vpop.permute.xlu0 %229
      %vm231 = vcmask 121856
      %v232 = vsel %vm231, %v228, %v230
      %v235 = vsel %vm231, %v222, %v228
      %v236 = vperm.slane %v172, 2
      %v237 = vperm.slane %v173, 2
      %v238 = vmul.f32 %v235, %v236
      %v239 = vmul.f32 %v232, %v237
      %240 = vst [vmem:[#allocation1] ss:$2 sm:$0xff] %v171
      %v241 = vld.sshfl [vmem:[#allocation1 + $0x8] sm:$0xff pattern:$0x75316420]
      %242 = vrot.lane.b32.xlu0 %v241, 1
      %v243 = vpop.permute.xlu0 %242
      %245 = vst [vmem:[#allocation1] ss:$2 sm:$0xff] %v171
      %v246 = vld.sshfl [vmem:[#allocation1] sm:$0xff pattern:$0x75316420]
      %v247 = vld.sshfl [vmem:[#allocation1 + $0x8] sm:$0xff pattern:$0x75316420]
      %248 = vrot.lane.b32.xlu0 %v246, 1
      %v249 = vpop.permute.xlu0 %248
      %250 = vrot.lane.b32.xlu0 %v247, 1
      %v251 = vpop.permute.xlu0 %250
      %vm252 = vcmask 7168
      %v253 = vsel %vm252, %v249, %v251
      %v256 = vsel %vm252, %v243, %v249
      %v257 = vperm.slane %v172, 3
      %v258 = vperm.slane %v173, 3
      %v259 = vmul.f32 %v256, %v257
      %v260 = vmul.f32 %v253, %v258
      %v261 = vperm.slane %v172, 4
      %v262 = vperm.slane %v173, 4
      %v265 = vrot.slane %v262, 4
      %vm266 = vcmask 1043456
      %v267 = vsel %vm266, %v261, %v265
      %v269 = vmul.f32 %v171, %v267
      %270 = vst [vmem:[#allocation1] ss:$2 sm:$0xff] %v171
      %v271 = vld.sshfl [vmem:[#allocation1] sm:$0xff pattern:$0x75316420]
      %v272 = vld.sshfl [vmem:[#allocation1 + $0x8] sm:$0xff pattern:$0x75316420]
      %273 = vrot.lane.b32.xlu0 %v271, 127
      %v274 = vpop.permute.xlu0 %273
      %275 = vrot.lane.b32.xlu0 %v272, 127
      %v276 = vpop.permute.xlu0 %275
      %vm277 = vcmask 1039360
      %v278 = vsel %vm277, %v274, %v276
      %281 = vst [vmem:[#allocation1] ss:$2 sm:$0xff] %v171
      %v282 = vld.sshfl [vmem:[#allocation1] sm:$0xff pattern:$0x75316420]
      %283 = vrot.lane.b32.xlu0 %v282, 127
      %v284 = vpop.permute.xlu0 %283
      %v286 = vsel %vm277, %v276, %v284
      %v287 = vperm.slane %v172, 5
      %v288 = vperm.slane %v173, 5
      %v289 = vmul.f32 %v278, %v287
      %v290 = vmul.f32 %v286, %v288
      %291 = vst [vmem:[#allocation1] ss:$2 sm:$0xff] %v171
      %v292 = vld.sshfl [vmem:[#allocation1] sm:$0xff pattern:$0x75316420]
      %v293 = vld.sshfl [vmem:[#allocation1 + $0x8] sm:$0xff pattern:$0x75316420]
      %294 = vrot.lane.b32.xlu0 %v292, 113
      %v295 = vpop.permute.xlu0 %294
      %296 = vrot.lane.b32.xlu0 %v293, 113
      %v297 = vpop.permute.xlu0 %296
      %vm298 = vcmask 924672
      %v299 = vsel %vm298, %v295, %v297
      %302 = vst [vmem:[#allocation1] ss:$2 sm:$0xff] %v171
      %v303 = vld.sshfl [vmem:[#allocation1] sm:$0xff pattern:$0x75316420]
      %304 = vrot.lane.b32.xlu0 %v303, 113
      %v305 = vpop.permute.xlu0 %304
      %v307 = vsel %vm298, %v297, %v305
      %v308 = vperm.slane %v172, 6
      %v309 = vperm.slane %v173, 6
      %v310 = vmul.f32 %v299, %v308
      %v311 = vmul.f32 %v307, %v309
      %312 = vst [vmem:[#allocation1] ss:$2 sm:$0xff] %v171
      %v313 = vld.sshfl [vmem:[#allocation1] sm:$0xff pattern:$0x75316420]
      %v314 = vld.sshfl [vmem:[#allocation1 + $0x8] sm:$0xff pattern:$0x75316420]
      %315 = vrot.lane.b32.xlu0 %v313, 112
      %v316 = vpop.permute.xlu0 %315
      %317 = vrot.lane.b32.xlu0 %v314, 112
      %v318 = vpop.permute.xlu0 %317
      %vm319 = vcmask 916480
      %v320 = vsel %vm319, %v316, %v318
      %323 = vst [vmem:[#allocation1] ss:$2 sm:$0xff] %v171
      %v324 = vld.sshfl [vmem:[#allocation1] sm:$0xff pattern:$0x75316420]
      %325 = vrot.lane.b32.xlu0 %v324, 112
      %v326 = vpop.permute.xlu0 %325
      %v328 = vsel %vm319, %v318, %v326
      %v329 = vperm.slane %v172, 7
      %v330 = vperm.slane %v173, 7
      %v331 = vmul.f32 %v320, %v329
      %v332 = vmul.f32 %v328, %v330
      %333 = vst [vmem:[#allocation1] ss:$2 sm:$0xff] %v171
      %v334 = vld.sshfl [vmem:[#allocation1] sm:$0xff pattern:$0x75316420]
      %v335 = vld.sshfl [vmem:[#allocation1 + $0x8] sm:$0xff pattern:$0x75316420]
      %336 = vrot.lane.b32.xlu0 %v334, 111
      %v337 = vpop.permute.xlu0 %336
      %338 = vrot.lane.b32.xlu0 %v335, 111
      %v339 = vpop.permute.xlu0 %338
      %vm340 = vcmask 908288
      %v341 = vsel %vm340, %v337, %v339
      %344 = vst [vmem:[#allocation1] ss:$2 sm:$0xff] %v171
      %v345 = vld.sshfl [vmem:[#allocation1] sm:$0xff pattern:$0x75316420]
      %346 = vrot.lane.b32.xlu0 %v345, 111
      %v347 = vpop.permute.xlu0 %346
      %v349 = vsel %vm340, %v339, %v347
      %v350 = vperm.slane %v174, 0
      %v351 = vperm.slane %v175, 0
      %v352 = vmul.f32 %v341, %v350
      %v353 = vmul.f32 %v349, %v351
      %v356 = vrot.slane %v217, 4
      %v357 = vrot.slane %v218, 4
      %v362 = vrot.slane %v259, 4
      %v363 = vrot.slane %v260, 4
      %367 = vst [vmem:[#allocation1] ss:$2 sm:$0xff] %v269
      %v368 = vld.sshfl [vmem:[#allocation1] sm:$0xff pattern:$0x75316420]
      %v369 = vld.sshfl [vmem:[#allocation1 + $0x8] sm:$0xff pattern:$0x75316420]
      %v374 = vrot.slane %v289, 4
      %v375 = vrot.slane %v290, 4
      %v380 = vrot.slane %v331, 4
      %v381 = vrot.slane %v332, 4
      %v384 = vsel %vm266, %v196, %v356
      %v385 = vsel %vm266, %v197, %v357
      %v386 = vsel %vm266, %v238, %v362
      %v387 = vsel %vm266, %v239, %v363
      %v388 = vsel %vm266, %v368, %v374
      %v389 = vsel %vm266, %v369, %v375
      %v390 = vsel %vm266, %v310, %v380
      %v391 = vsel %vm266, %v311, %v381
      %v392 = vsel %vm266, %v352, 1.0
      %v393 = vsel %vm266, %v353, 1.0
      %vm394 = vcmask 1044480
      %v395 = vsel %vm394, %v392, 0.0
      %v396 = vsel %vm394, %v393, 0.0
      %v397 = vld [vmem:[%s1] sm:$0xff]
      %vm398 = vcmask 392192
      %v400 = vsel %vm398, %v397, 0
      %402 = vmatpush.msra.mxu0 0.0
      %403 = vmatpush.msra.mxu0 0.0
      %404 = vmatpush.msra.mxu0 0.0
      %405 = vmatpush.msra.mxu0 0.0
      %406 = vmatpush.msra.mxu0 0.0
      %407 = vmatpush.msra.mxu0 0.0
      %408 = vmatpush.msra.mxu0 0.0
      %409 = vmatpush.msra.mxu0 0.0
      %410 = vmatpush.msra.mxu0 0.0
      %411 = vmatpush.msra.mxu0 0.0
      %412 = vmatpush.msra.mxu0 0.0
      %413 = vmatpush.msra.mxu0 %v395
      %414 = vmatpush.msra.mxu0 %v390
      %415 = vmatpush.msra.mxu0 %v388
      %416 = vmatpush.msra.mxu0 %v386
      %417 = vmatpush.msra.mxu0 %v384
      %418 = vmatmul.f32.gmra.mxu0 %v400
      %v419 = vpop.f32.mrf.mxu0
      %v420 = vadd.f32 0.0, %v419
      %421 = vdwg.mxu0
      %422 = vmatpush.msra.mxu0 0.0
      %423 = vmatpush.msra.mxu0 0.0
      %424 = vmatpush.msra.mxu0 0.0
      %425 = vmatpush.msra.mxu0 0.0
      %426 = vmatpush.msra.mxu0 0.0
      %427 = vmatpush.msra.mxu0 0.0
      %428 = vmatpush.msra.mxu0 0.0
      %429 = vmatpush.msra.mxu0 0.0
      %430 = vmatpush.msra.mxu0 0.0
      %431 = vmatpush.msra.mxu0 0.0
      %432 = vmatpush.msra.mxu0 0.0
      %433 = vmatpush.msra.mxu0 %v396
      %434 = vmatpush.msra.mxu0 %v391
      %435 = vmatpush.msra.mxu0 %v389
      %436 = vmatpush.msra.mxu0 %v387
      %437 = vmatpush.msra.mxu0 %v385
      %438 = vmatmul.f32.gmra.mxu0 %v400
      %v439 = vpop.f32.mrf.mxu0
      %v440 = vadd.f32 0.0, %v439
      %441 = vdwg.mxu0
      %v442 = vmax.f32 %v420, 0.0
      %v443 = vmax.f32 %v440, 0.0
      %444 = vst [vmem:[%s170] sm:$0xff] %v442
      %445 = vst [vmem:[%s170 + $0x8] sm:$0xff] %v443
      %p446 = scmp.lt.s32.totalorder %s14, 1
      %s447 = scalar_select %p446, %s14, 1
      %s448 = smul.addr %s447, 2
      %s449 = smul.addr %s448, 8
      %s450 = scalar_lea.vmem %s3, %s449
      // Predicated region
      $region33: #{conv2d_block.1} parent=31 // pred_check
        %p451 = pneg %p100
      $region34: #{conv2d_block.1} parent=31 // pred_check_branch
        %453 = sbr.rel (%p451) target = $region36
      $region35: #{conv2d_block.1} parent=31 // pred_region
        _
      $region36: #{conv2d_block.1} parent=31 // pred_fallthru
        _
    $region32: #{conv2d_block.1} parent=5 // pred_fallthru
      _
    %p454 = scmp.le.s32.totalorder 2, %s9
    // Predicated region
    $region37: #{conv2d_block.1} parent=5 // pred_check
      %p455 = pneg %p454
    $region38: #{conv2d_block.1} parent=5 // pred_check_branch
      %457 = sbr.rel (%p455) target = $region40
    $region39: #{conv2d_block.1} parent=5 // pred_region
      %s458 = ssub.s32 %s9, 2
      // Predicated region
      $region41: #{conv2d_block.1} parent=39 // pred_check
        %p459 = pneg %p106
      $region42: #{conv2d_block.1} parent=39 // pred_check_branch
        %461 = sbr.rel (%p459) target = $region44
      $region43: #{conv2d_block.1} parent=39 // pred_region
        %p462 = scmp.lt.s32.totalorder %s15, 1
        %s463 = scalar_select %p462, %s15, 1
        %s464 = smul.addr %s463, 2
        %s465 = smul.addr %s464, 8
        %s466 = scalar_lea.vmem %s3, %s465
      $region44: #{conv2d_block.1} parent=39 // pred_fallthru
        _
    $region40: #{conv2d_block.1} parent=5 // pred_fallthru
      _
  $region6: #{conv2d_block.1} parent=0 // loop_footer
    %s13 = sadd.s32 1, %s9
  $region7: #{conv2d_block.1} parent=0 // loop_footer_branch
    %8 = sbr.rel target = $region3
  $region8: #{conv2d_block.1} parent=0 // loop_exit
    _

</llo_original>
